<compile_context>
chip_gen: v5e
topology: v5e:2x2
jax: 0.10.0
libtpu: 0.0.40
codegen_flags: <defaults>
</compile_context>

<pallas_src>
import jax
import jax.numpy as jnp
from jax.experimental import pallas as pl
from jax.experimental.pallas import tpu as pltpu

EPS = 1e-5


def _round_up(x, m):
    return ((x + m - 1) // m) * m


def _mlp_kernel(x_ref,
                w1_ref, b1_ref, w2_ref, b2_ref, w3_ref, b3_ref,
                w4t_ref, b4_ref,
                o_ref):
    """Fused 4-layer MLP on one batch tile.  BatchNorm is pre-folded into the
    weights in the wrapper; eval-mode Dropout is identity.  The final 1-wide
    head is emitted as a (1, tile) lane-dense row (batch on lanes)."""

    def layer(h, w_ref, b_ref):
        acc = jnp.dot(h.astype(w_ref.dtype), w_ref[...],
                      preferred_element_type=jnp.float32)
        return jnp.maximum(acc + b_ref[...], 0.0)

    h = x_ref[...]
    h = layer(h, w1_ref, b1_ref)          # (tile, 128)
    h = layer(h, w2_ref, b2_ref)          # (tile, 64)
    h = layer(h, w3_ref, b3_ref)          # (tile, 32)

    # Final projection: (1, H3) x (tile, H3)^T -> (1, tile); output row is
    # lane-dense (batch mapped to lanes), so the store is an unmasked vst.
    out_row = jax.lax.dot_general(
        w4t_ref[...], h.astype(w4t_ref.dtype),
        dimension_numbers=(((1,), (1,)), ((), ())),
        preferred_element_type=jnp.float32)
    o_ref[...] = (out_row + b4_ref[...]).astype(o_ref.dtype)


def fold_params(params, compute_dtype=jnp.bfloat16):
    """Fold eval-mode BatchNorm affines into the following Linear layer.

    Call ONCE per parameter set (outside the serving hot path) and reuse the
    result.  Returns (w1, b1, w2, b2, w3, b3, w4t, b4); weights cast to
    compute_dtype, biases kept float32, w4t is the transposed (1, H3) head.
    """
    (w1, b1, g1, be1, m1, v1,
     w2, b2, g2, be2, m2, v2,
     w3, b3, g3, be3, m3, v3,
     w4, b4) = params

    def bn_affine(g, be, m, v):
        scale = g * jax.lax.rsqrt(v + EPS)   # (1, H)
        shift = be - m * scale               # (1, H)
        return scale, shift

    s1, t1 = bn_affine(g1, be1, m1, v1)
    s2, t2 = bn_affine(g2, be2, m2, v2)
    s3, t3 = bn_affine(g3, be3, m3, v3)

    # (h*s + t) @ W + b == h @ (s^T * W) + (t @ W + b)
    w2f = w2 * s1.reshape(-1, 1)
    b2f = t1 @ w2 + b2
    w3f = w3 * s2.reshape(-1, 1)
    b3f = t2 @ w3 + b3
    w4f = w4 * s3.reshape(-1, 1)
    b4f = t3 @ w4 + b4

    w4t = w4f.T                              # (1, H3): lane-dense head row

    ws = tuple(w.astype(compute_dtype) for w in (w1, w2f, w3f, w4t))
    bs = tuple(b.astype(jnp.float32) for b in (b1, b2f, b3f, b4f))
    return (ws[0], bs[0], ws[1], bs[1], ws[2], bs[2], ws[3], bs[3])


def neural_network_forward(x, folded_params, *, max_batch_tile=1024):
    """x: (B, input_dim).  folded_params: output of fold_params().
    Returns (B, 1) float32 predictions (eval-mode forward)."""
    B, D = x.shape
    w1, b1, w2, b2, w3, b3, w4t, b4 = folded_params
    compute_dtype = w1.dtype
    H1, H2, H3 = w1.shape[1], w2.shape[1], w3.shape[1]

    # Adaptive batch tile: big tiles for big batches (amortize per-step
    # overhead) but always >=2 tiles when B > 128 so v7x's two TensorCores
    # both get work.  Multiple of 128 keeps the (1, tile) output lane-aligned.
    tile = max(128, min(int(max_batch_tile),
                        _round_up(int(pl.cdiv(B, 2)), 128)))
    n_tiles = int(pl.cdiv(B, tile))
    Bp = n_tiles * tile

    xp = x.astype(compute_dtype)
    if Bp != B:
        xp = jnp.pad(xp, ((0, Bp - B), (0, 0)))

    def full_spec(arr):
        # Whole (small) parameter tensor resident in VMEM at every grid step.
        return pl.BlockSpec(arr.shape, lambda i: (0,) * arr.ndim)

    weight_args = (w1, b1, w2, b2, w3, b3, w4t, b4)
    in_specs = [pl.BlockSpec((tile, D), lambda i: (i, 0))]
    in_specs += [full_spec(a) for a in weight_args]
    # Transposed lane-dense output: (1, Bp) f32, one (1, tile) row per step.
    out_spec = pl.BlockSpec((1, tile), lambda i: (0, i))

    itemsize = jnp.dtype(compute_dtype).itemsize
    flops = 2 * Bp * (D * H1 + H1 * H2 + H2 * H3 + H3 * 1)
    bytes_accessed = (Bp * D * itemsize
                      + sum(int(a.size) * a.dtype.itemsize for a in weight_args)
                      + Bp * 4)
    cost = pl.CostEstimate(flops=flops, transcendentals=0,
                           bytes_accessed=bytes_accessed)

    fn = pl.pallas_call(
        _mlp_kernel,
        out_shape=jax.ShapeDtypeStruct((1, Bp), jnp.float32),
        grid_spec=pltpu.PrefetchScalarGridSpec(
            num_scalar_prefetch=0,
            grid=(n_tiles,),
            in_specs=in_specs,
            out_specs=out_spec,
        ),
        compiler_params=pltpu.CompilerParams(
            dimension_semantics=("parallel",)),
        cost_estimate=cost,
    )
    out = fn(xp, *weight_args)
    return out[0, :B].reshape(B, 1)


def init_params(key, input_dim, hidden_layers=(128, 64, 32)):
    """Deterministic init mimicking PyTorch defaults (Linear: U(-1/sqrt(fan_in),
    1/sqrt(fan_in)); BatchNorm: gamma=1, beta=0, running_mean=0, running_var=1)."""
    params = []
    prev = input_dim
    dims = list(hidden_layers)
    keys = jax.random.split(key, 2 * (len(dims) + 1))
    ki = 0
    for h in dims:
        bound = 1.0 / jnp.sqrt(prev)
        w = jax.random.uniform(keys[ki], (prev, h), jnp.float32, -bound, bound); ki += 1
        b = jax.random.uniform(keys[ki], (1, h), jnp.float32, -bound, bound); ki += 1
        gamma = jnp.ones((1, h), jnp.float32)
        beta = jnp.zeros((1, h), jnp.float32)
        run_mean = jnp.zeros((1, h), jnp.float32)
        run_var = jnp.ones((1, h), jnp.float32)
        params += [w, b, gamma, beta, run_mean, run_var]
        prev = h
    bound = 1.0 / jnp.sqrt(prev)
    w_out = jax.random.uniform(keys[ki], (prev, 1), jnp.float32, -bound, bound); ki += 1
    b_out = jax.random.uniform(keys[ki], (1, 1), jnp.float32, -bound, bound); ki += 1
    params += [w_out, b_out]
    return tuple(params)


def reference_forward(x, params):
    """Pure-JAX float32 reference with PyTorch eval-mode semantics (unfolded BN)."""
    (w1, b1, g1, be1, m1, v1,
     w2, b2, g2, be2, m2, v2,
     w3, b3, g3, be3, m3, v3,
     w4, b4) = params

    def block(h, w, b, g, be, m, v):
        h = h @ w + b
        h = jnp.maximum(h, 0.0)
        return (h - m) / jnp.sqrt(v + EPS) * g + be

    h = block(x, w1, b1, g1, be1, m1, v1)
    h = block(h, w2, b2, g2, be2, m2, v2)
    h = block(h, w3, b3, g3, be3, m3, v3)
    return h @ w4 + b4


if __name__ == "__main__":
    key = jax.random.PRNGKey(0)
    k_x, k_p = jax.random.split(key)

    B, input_dim = 512, 32          # adaptive tiling -> 2 tiles of 256 (fills both v7x TCs)
    x = jax.random.normal(k_x, (B, input_dim), jnp.float32)
    params = init_params(k_p, input_dim, hidden_layers=(128, 64, 32))

    ref = reference_forward(x, params)

    # Fold BN / cast / transpose ONCE per parameter set (hoisted out of the
    # per-forward hot path) and reuse across calls.
    folded_f32 = fold_params(params, compute_dtype=jnp.float32)
    folded_bf16 = fold_params(params, compute_dtype=jnp.bfloat16)

    # float32 path: tight correctness check (BN folding only reassociates).
    out_f32 = neural_network_forward(x, folded_f32)
    out_f32 = jax.block_until_ready(out_f32)
    assert out_f32.shape == (B, 1)
    assert jnp.allclose(out_f32, ref, atol=1e-4, rtol=1e-4), \
        "float32 Pallas output mismatch vs reference"

    # bfloat16 streaming path (default): f32 accumulation, looser tolerance.
    out_bf16 = neural_network_forward(x, folded_bf16)
    out_bf16 = jax.block_until_ready(out_bf16)
    assert out_bf16.shape == (B, 1)
    assert jnp.allclose(out_bf16, ref, atol=5e-2, rtol=5e-2), \
        "bfloat16 Pallas output mismatch vs reference"

    # Ragged batch (not a multiple of the tile) exercises cdiv + padding.
    B_small = 100
    out_small = neural_network_forward(x[:B_small], folded_f32)
    out_small = jax.block_until_ready(out_small)
    assert out_small.shape == (B_small, 1)
    assert jnp.allclose(out_small, ref[:B_small], atol=1e-4, rtol=1e-4), \
        "ragged-batch Pallas output mismatch vs reference"

    print("KERNEL_OK")
</pallas_src>

<mosaic_0001>
module attributes {stable_mosaic.version = 11 : i64} {
  func.func @_mlp_kernel(%arg0: i32, %arg1: memref<256x32xf32, #tpu.memory_space<vmem>>, %arg2: memref<32x128xf32, #tpu.memory_space<vmem>>, %arg3: memref<1x128xf32, #tpu.memory_space<vmem>>, %arg4: memref<128x64xf32, #tpu.memory_space<vmem>>, %arg5: memref<1x64xf32, #tpu.memory_space<vmem>>, %arg6: memref<64x32xf32, #tpu.memory_space<vmem>>, %arg7: memref<1x32xf32, #tpu.memory_space<vmem>>, %arg8: memref<1x32xf32, #tpu.memory_space<vmem>>, %arg9: memref<1x1xf32, #tpu.memory_space<vmem>>, %arg10: memref<1x256xf32, #tpu.memory_space<vmem>>) attributes {dimension_semantics = [#tpu.dimension_semantics<parallel>], iteration_bounds = array<i64: 2>, scalar_prefetch = 0 : i64, scratch_operands = 0 : i64, tpu.core_type = #tpu.core_type<tc>, window_params = [{transform_indices = @transform_0, window_bounds = array<i64: 256, 32>}, {pipeline_mode = #tpu.pipeline_mode<synchronous>, transform_indices = @transform_1, window_bounds = array<i64: 32, 128>}, {pipeline_mode = #tpu.pipeline_mode<synchronous>, transform_indices = @transform_2, window_bounds = array<i64: 1, 128>}, {pipeline_mode = #tpu.pipeline_mode<synchronous>, transform_indices = @transform_3, window_bounds = array<i64: 128, 64>}, {pipeline_mode = #tpu.pipeline_mode<synchronous>, transform_indices = @transform_4, window_bounds = array<i64: 1, 64>}, {pipeline_mode = #tpu.pipeline_mode<synchronous>, transform_indices = @transform_5, window_bounds = array<i64: 64, 32>}, {pipeline_mode = #tpu.pipeline_mode<synchronous>, transform_indices = @transform_6, window_bounds = array<i64: 1, 32>}, {pipeline_mode = #tpu.pipeline_mode<synchronous>, transform_indices = @transform_7, window_bounds = array<i64: 1, 32>}, {pipeline_mode = #tpu.pipeline_mode<synchronous>, transform_indices = @transform_8, window_bounds = array<i64: 1, 1>}, {transform_indices = @transform_9, window_bounds = array<i64: 1, 256>}]} {
    %c0 = arith.constant 0 : index
    %c0_0 = arith.constant 0 : index
    %0 = vector.load %arg1[%c0, %c0_0] : memref<256x32xf32, #tpu.memory_space<vmem>>, vector<256x32xf32>
    %c0_1 = arith.constant 0 : index
    %c0_2 = arith.constant 0 : index
    %1 = vector.load %arg2[%c0_1, %c0_2] : memref<32x128xf32, #tpu.memory_space<vmem>>, vector<32x128xf32>
    %cst = arith.constant dense<0.000000e+00> : vector<256x128xf32>
    %2 = tpu.matmul %0, %1, %cst {dimension_numbers = #tpu.dot_dimension_numbers<[1], [0], [0], [1], [0, 0, 1, 1], [], []>} : vector<256x32xf32>, vector<32x128xf32>, vector<256x128xf32> -> vector<256x128xf32>
    %c0_3 = arith.constant 0 : index
    %c0_4 = arith.constant 0 : index
    %3 = vector.load %arg3[%c0_3, %c0_4] : memref<1x128xf32, #tpu.memory_space<vmem>>, vector<1x128xf32>
    %4 = vector.broadcast %3 : vector<1x128xf32> to vector<256x128xf32>
    %5 = arith.addf %2, %4 : vector<256x128xf32>
    %cst_5 = arith.constant 0.000000e+00 : f32
    %6 = vector.broadcast %cst_5 : f32 to vector<256x128xf32>
    %7 = arith.maximumf %5, %6 : vector<256x128xf32>
    %c0_6 = arith.constant 0 : index
    %c0_7 = arith.constant 0 : index
    %8 = vector.load %arg4[%c0_6, %c0_7] : memref<128x64xf32, #tpu.memory_space<vmem>>, vector<128x64xf32>
    %cst_8 = arith.constant dense<0.000000e+00> : vector<256x64xf32>
    %9 = tpu.matmul %7, %8, %cst_8 {dimension_numbers = #tpu.dot_dimension_numbers<[1], [0], [0], [1], [0, 0, 1, 1], [], []>} : vector<256x128xf32>, vector<128x64xf32>, vector<256x64xf32> -> vector<256x64xf32>
    %c0_9 = arith.constant 0 : index
    %c0_10 = arith.constant 0 : index
    %10 = vector.load %arg5[%c0_9, %c0_10] : memref<1x64xf32, #tpu.memory_space<vmem>>, vector<1x64xf32>
    %11 = vector.broadcast %10 : vector<1x64xf32> to vector<256x64xf32>
    %12 = arith.addf %9, %11 : vector<256x64xf32>
    %cst_11 = arith.constant 0.000000e+00 : f32
    %13 = vector.broadcast %cst_11 : f32 to vector<256x64xf32>
    %14 = arith.maximumf %12, %13 : vector<256x64xf32>
    %c0_12 = arith.constant 0 : index
    %c0_13 = arith.constant 0 : index
    %15 = vector.load %arg6[%c0_12, %c0_13] : memref<64x32xf32, #tpu.memory_space<vmem>>, vector<64x32xf32>
    %cst_14 = arith.constant dense<0.000000e+00> : vector<256x32xf32>
    %16 = tpu.matmul %14, %15, %cst_14 {dimension_numbers = #tpu.dot_dimension_numbers<[1], [0], [0], [1], [0, 0, 1, 1], [], []>} : vector<256x64xf32>, vector<64x32xf32>, vector<256x32xf32> -> vector<256x32xf32>
    %c0_15 = arith.constant 0 : index
    %c0_16 = arith.constant 0 : index
    %17 = vector.load %arg7[%c0_15, %c0_16] : memref<1x32xf32, #tpu.memory_space<vmem>>, vector<1x32xf32>
    %18 = vector.broadcast %17 : vector<1x32xf32> to vector<256x32xf32>
    %19 = arith.addf %16, %18 : vector<256x32xf32>
    %cst_17 = arith.constant 0.000000e+00 : f32
    %20 = vector.broadcast %cst_17 : f32 to vector<256x32xf32>
    %21 = arith.maximumf %19, %20 : vector<256x32xf32>
    %c0_18 = arith.constant 0 : index
    %c0_19 = arith.constant 0 : index
    %22 = vector.load %arg8[%c0_18, %c0_19] : memref<1x32xf32, #tpu.memory_space<vmem>>, vector<1x32xf32>
    %cst_20 = arith.constant dense<0.000000e+00> : vector<1x256xf32>
    %23 = tpu.matmul %22, %21, %cst_20 {dimension_numbers = #tpu.dot_dimension_numbers<[1], [1], [0], [0], [0, 0, 1, 0], [], []>} : vector<1x32xf32>, vector<256x32xf32>, vector<1x256xf32> -> vector<1x256xf32>
    %c0_21 = arith.constant 0 : index
    %c0_22 = arith.constant 0 : index
    %24 = vector.load %arg9[%c0_21, %c0_22] : memref<1x1xf32, #tpu.memory_space<vmem>>, vector<1x1xf32>
    %25 = vector.broadcast %24 : vector<1x1xf32> to vector<1x256xf32>
    %26 = arith.addf %23, %25 : vector<1x256xf32>
    %c0_23 = arith.constant 0 : index
    %c0_24 = arith.constant 0 : index
    %27 = vector.load %arg10[%c0_23, %c0_24] : memref<1x256xf32, #tpu.memory_space<vmem>>, vector<1x256xf32>
    tpu.vector_store %arg10[%c0_23, %c0_24], %26 {strides = array<i32>} : memref<1x256xf32, #tpu.memory_space<vmem>>, vector<1x256xf32>,
    return
  }
  func.func @transform_0(%arg0: i32) -> (i32, i32) {
    %c0_i32 = arith.constant 0 : i32
    %c0_i32_0 = arith.constant 0 : i32
    return %arg0, %c0_i32 : i32, i32
  }
  func.func @transform_1(%arg0: i32) -> (i32, i32) {
    %c0_i32 = arith.constant 0 : i32
    %c0_i32_0 = arith.constant 0 : i32
    %c0_i32_1 = arith.constant 0 : i32
    return %c0_i32, %c0_i32_0 : i32, i32
  }
  func.func @transform_2(%arg0: i32) -> (i32, i32) {
    %c0_i32 = arith.constant 0 : i32
    %c0_i32_0 = arith.constant 0 : i32
    %c0_i32_1 = arith.constant 0 : i32
    return %c0_i32, %c0_i32_0 : i32, i32
  }
  func.func @transform_3(%arg0: i32) -> (i32, i32) {
    %c0_i32 = arith.constant 0 : i32
    %c0_i32_0 = arith.constant 0 : i32
    %c0_i32_1 = arith.constant 0 : i32
    return %c0_i32, %c0_i32_0 : i32, i32
  }
  func.func @transform_4(%arg0: i32) -> (i32, i32) {
    %c0_i32 = arith.constant 0 : i32
    %c0_i32_0 = arith.constant 0 : i32
    %c0_i32_1 = arith.constant 0 : i32
    return %c0_i32, %c0_i32_0 : i32, i32
  }
  func.func @transform_5(%arg0: i32) -> (i32, i32) {
    %c0_i32 = arith.constant 0 : i32
    %c0_i32_0 = arith.constant 0 : i32
    %c0_i32_1 = arith.constant 0 : i32
    return %c0_i32, %c0_i32_0 : i32, i32
  }
  func.func @transform_6(%arg0: i32) -> (i32, i32) {
    %c0_i32 = arith.constant 0 : i32
    %c0_i32_0 = arith.constant 0 : i32
    %c0_i32_1 = arith.constant 0 : i32
    return %c0_i32, %c0_i32_0 : i32, i32
  }
  func.func @transform_7(%arg0: i32) -> (i32, i32) {
    %c0_i32 = arith.constant 0 : i32
    %c0_i32_0 = arith.constant 0 : i32
    %c0_i32_1 = arith.constant 0 : i32
    return %c0_i32, %c0_i32_0 : i32, i32
  }
  func.func @transform_8(%arg0: i32) -> (i32, i32) {
    %c0_i32 = arith.constant 0 : i32
    %c0_i32_0 = arith.constant 0 : i32
    %c0_i32_1 = arith.constant 0 : i32
    return %c0_i32, %c0_i32_0 : i32, i32
  }
  func.func @transform_9(%arg0: i32) -> (i32, i32) {
    %c0_i32 = arith.constant 0 : i32
    %c0_i32_0 = arith.constant 0 : i32
    return %c0_i32, %arg0 : i32, i32
  }
}

</mosaic_0001>

<llo_original>
// kernel: tpu_custom_call.1
$region0: #{tpu_custom_call.1}
  #allocation0 [shape = 'u32[]', space=smem, size = 0x4, offset = 0x4, fixed_abs, tag = 'smem constant byte address 0x4 - core index']
  #allocation1 [shape = 'u32[72,128]{1,0:T(1,128)}', space=vmem, size = 0x9000, scoped, tag = 'internal scratch']
  #allocation2 [shape = 'f32[1,1]{1,0:T(1,128)S(1)}', space=vmem, size = 0x200, scoped, tag = 'scoped memory for tpu_custom_call.1']
  %s0 = inlined_call_operand.vmem [shape: f32[512,32], index: 0, kind: input, shape index: {}]
  %s1 = inlined_call_operand.vmem [shape: f32[32,128], index: 1, kind: input, shape index: {}]
  %s2 = inlined_call_operand.vmem [shape: f32[1,128], index: 2, kind: input, shape index: {}]
  %s3 = inlined_call_operand.vmem [shape: f32[128,64], index: 3, kind: input, shape index: {}]
  %s4 = inlined_call_operand.vmem [shape: f32[1,64], index: 4, kind: input, shape index: {}]
  %s5 = inlined_call_operand.vmem [shape: f32[64,32], index: 5, kind: input, shape index: {}]
  %s6 = inlined_call_operand.vmem [shape: f32[1,32], index: 6, kind: input, shape index: {}]
  %s7 = inlined_call_operand.vmem [shape: f32[1,32], index: 7, kind: input, shape index: {}]
  %s8 = inlined_call_operand.<no memory space> [shape: f32[1,1], index: 8, kind: input, shape index: {}]
  %s9 = inlined_call_operand.hbm [shape: f32[1,512], index: 9, kind: output, shape index: {}]
  %s10 = sld [smem:[#allocation0]]
  $region69: #{tpu_custom_call.1} parent=0
    _
  %s12 = ssub.s32 1, %s10
  %s13 = scalar_select 0, %s12, %s10
  %v14 = vstv %s8
  %15 = vst [vmem:[#allocation2] sm:$0x1] %v14
  $region1: #{tpu_custom_call.1} parent=0
    #allocation3 [shape = 'u8[2048]{0}', space=vmem, size = 0x800, scoped, tag = 'output window, operand 0']
    #allocation4 [shape = 's32[2]{0}', space=sflag, size = 0x8, scoped, tag = 'scoped memory for tpu_custom_call.1']
    %16 = vsyncpa [#allocation4], 0
    %s17 = scalar_lea.sflag [#allocation4], 1
    %18 = vsyncpa %s17, 0
    loop: start=0, step=1, limit=4
    $region2: #{tpu_custom_call.1} parent=1 // loop_pre_header
      _
    $region3: #{tpu_custom_call.1} parent=1 // loop_header
      %s20 = sphi 0, %s24
      %p21 = scmp.ge.s32.totalorder %s20, 4
      %s30 = sphi 0, %s32
      %s33 = sphi 0, %s30
      %s34 = sphi 0, %s33
      %s50 = sphi 0, %s34
      %s54 = sphi 0, %s54
      %s56 = sphi 0, %s54
      %s57 = sphi 0, %s56
      %s71 = sphi 0, %s57
      %s75 = sphi 0, %s75
      %s77 = sphi 0, %s75
      %s78 = sphi 0, %s77
      %s92 = sphi 0, %s78
      %s96 = sphi 0, %s96
      %s98 = sphi 0, %s96
      %s99 = sphi 0, %s98
      %s113 = sphi 0, %s99
      %s117 = sphi 0, %s117
      %s119 = sphi 0, %s117
      %s120 = sphi 0, %s119
      %s134 = sphi 0, %s120
      %s138 = sphi 0, %s138
      %s140 = sphi 0, %s138
      %s141 = sphi 0, %s140
      %s155 = sphi 0, %s141
      %s159 = sphi 0, %s159
      %s161 = sphi 0, %s159
      %s162 = sphi 0, %s161
      %s176 = sphi 0, %s162
      %s180 = sphi 0, %s180
      %s182 = sphi 0, %s180
      %s183 = sphi 0, %s182
      %s197 = sphi 0, %s183
      %s201 = sphi 0, %s201
      %s203 = sphi 0, %s201
      %s204 = sphi 0, %s203
      %s218 = sphi 0, %s204
      %s224 = sphi 0, %s226
      %s227 = sphi 0, %s224
      %s228 = sphi 0, %s227
      %s244 = sphi 0, %s228
    $region4: #{tpu_custom_call.1} parent=1 // loop_header_branch
      %23 = sbr.rel (%p21) target = $region8
    $region5: #{tpu_custom_call.1} parent=1 // loop_body
      %s25 = ssub.s32 %s20, 1
      %s26 = ssub.s32 %s20, 2
      %s27 = sadd.s32 %s20, 1
      %s28 = ssub.s32 %s20, %s27
      %p29 = scmp.eq.s32.totalorder %s28, 0
      %s31 = sadd.s32 %s30, 1
      %s32 = scalar_select %p29, %s30, %s31
      %p35 = pneg %p29
      %p36 = scmp.eq.s32.totalorder %s20, 1
      %p37 = por %p35, %p36
      %p38 = scmp.ne.s32.totalorder %s30, %s33
      %p39 = scmp.eq.s32.totalorder %s20, 0
      %p40 = por %p38, %p39
      %p41 = scmp.ne.s32.totalorder %s30, %s33
      %p42 = scmp.eq.s32.totalorder %s25, 1
      %p43 = por %p41, %p42
      %p44 = scmp.ne.s32.totalorder %s33, %s34
      %p45 = scmp.eq.s32.totalorder %s25, 0
      %p46 = por %p44, %p45
      %p47 = scmp.ne.s32.totalorder %s33, %s34
      %p48 = scmp.eq.s32.totalorder %s26, 1
      %p49 = por %p47, %p48
      %p51 = scmp.ne.s32.totalorder %s34, %s50
      %p52 = scmp.eq.s32.totalorder %s26, 0
      %p53 = por %p51, %p52
      %s55 = sadd.s32 %s54, 1
      %p58 = scmp.eq.s32.totalorder %s20, 1
      %p59 = scmp.ne.s32.totalorder %s54, %s56
      %p60 = scmp.eq.s32.totalorder %s20, 0
      %p61 = por %p59, %p60
      %p62 = scmp.ne.s32.totalorder %s54, %s56
      %p63 = scmp.eq.s32.totalorder %s25, 1
      %p64 = por %p62, %p63
      %p65 = scmp.ne.s32.totalorder %s56, %s57
      %p66 = scmp.eq.s32.totalorder %s25, 0
      %p67 = por %p65, %p66
      %p68 = scmp.ne.s32.totalorder %s56, %s57
      %p69 = scmp.eq.s32.totalorder %s26, 1
      %p70 = por %p68, %p69
      %p72 = scmp.ne.s32.totalorder %s57, %s71
      %p73 = scmp.eq.s32.totalorder %s26, 0
      %p74 = por %p72, %p73
      %s76 = sadd.s32 %s75, 1
      %p79 = scmp.eq.s32.totalorder %s20, 1
      %p80 = scmp.ne.s32.totalorder %s75, %s77
      %p81 = scmp.eq.s32.totalorder %s20, 0
      %p82 = por %p80, %p81
      %p83 = scmp.ne.s32.totalorder %s75, %s77
      %p84 = scmp.eq.s32.totalorder %s25, 1
      %p85 = por %p83, %p84
      %p86 = scmp.ne.s32.totalorder %s77, %s78
      %p87 = scmp.eq.s32.totalorder %s25, 0
      %p88 = por %p86, %p87
      %p89 = scmp.ne.s32.totalorder %s77, %s78
      %p90 = scmp.eq.s32.totalorder %s26, 1
      %p91 = por %p89, %p90
      %p93 = scmp.ne.s32.totalorder %s78, %s92
      %p94 = scmp.eq.s32.totalorder %s26, 0
      %p95 = por %p93, %p94
      %s97 = sadd.s32 %s96, 1
      %p100 = scmp.eq.s32.totalorder %s20, 1
      %p101 = scmp.ne.s32.totalorder %s96, %s98
      %p102 = scmp.eq.s32.totalorder %s20, 0
      %p103 = por %p101, %p102
      %p104 = scmp.ne.s32.totalorder %s96, %s98
      %p105 = scmp.eq.s32.totalorder %s25, 1
      %p106 = por %p104, %p105
      %p107 = scmp.ne.s32.totalorder %s98, %s99
      %p108 = scmp.eq.s32.totalorder %s25, 0
      %p109 = por %p107, %p108
      %p110 = scmp.ne.s32.totalorder %s98, %s99
      %p111 = scmp.eq.s32.totalorder %s26, 1
      %p112 = por %p110, %p111
      %p114 = scmp.ne.s32.totalorder %s99, %s113
      %p115 = scmp.eq.s32.totalorder %s26, 0
      %p116 = por %p114, %p115
      %s118 = sadd.s32 %s117, 1
      %p121 = scmp.eq.s32.totalorder %s20, 1
      %p122 = scmp.ne.s32.totalorder %s117, %s119
      %p123 = scmp.eq.s32.totalorder %s20, 0
      %p124 = por %p122, %p123
      %p125 = scmp.ne.s32.totalorder %s117, %s119
      %p126 = scmp.eq.s32.totalorder %s25, 1
      %p127 = por %p125, %p126
      %p128 = scmp.ne.s32.totalorder %s119, %s120
      %p129 = scmp.eq.s32.totalorder %s25, 0
      %p130 = por %p128, %p129
      %p131 = scmp.ne.s32.totalorder %s119, %s120
      %p132 = scmp.eq.s32.totalorder %s26, 1
      %p133 = por %p131, %p132
      %p135 = scmp.ne.s32.totalorder %s120, %s134
      %p136 = scmp.eq.s32.totalorder %s26, 0
      %p137 = por %p135, %p136
      %s139 = sadd.s32 %s138, 1
      %p142 = scmp.eq.s32.totalorder %s20, 1
      %p143 = scmp.ne.s32.totalorder %s138, %s140
      %p144 = scmp.eq.s32.totalorder %s20, 0
      %p145 = por %p143, %p144
      %p146 = scmp.ne.s32.totalorder %s138, %s140
      %p147 = scmp.eq.s32.totalorder %s25, 1
      %p148 = por %p146, %p147
      %p149 = scmp.ne.s32.totalorder %s140, %s141
      %p150 = scmp.eq.s32.totalorder %s25, 0
      %p151 = por %p149, %p150
      %p152 = scmp.ne.s32.totalorder %s140, %s141
      %p153 = scmp.eq.s32.totalorder %s26, 1
      %p154 = por %p152, %p153
      %p156 = scmp.ne.s32.totalorder %s141, %s155
      %p157 = scmp.eq.s32.totalorder %s26, 0
      %p158 = por %p156, %p157
      %s160 = sadd.s32 %s159, 1
      %p163 = scmp.eq.s32.totalorder %s20, 1
      %p164 = scmp.ne.s32.totalorder %s159, %s161
      %p165 = scmp.eq.s32.totalorder %s20, 0
      %p166 = por %p164, %p165
      %p167 = scmp.ne.s32.totalorder %s159, %s161
      %p168 = scmp.eq.s32.totalorder %s25, 1
      %p169 = por %p167, %p168
      %p170 = scmp.ne.s32.totalorder %s161, %s162
      %p171 = scmp.eq.s32.totalorder %s25, 0
      %p172 = por %p170, %p171
      %p173 = scmp.ne.s32.totalorder %s161, %s162
      %p174 = scmp.eq.s32.totalorder %s26, 1
      %p175 = por %p173, %p174
      %p177 = scmp.ne.s32.totalorder %s162, %s176
      %p178 = scmp.eq.s32.totalorder %s26, 0
      %p179 = por %p177, %p178
      %s181 = sadd.s32 %s180, 1
      %p184 = scmp.eq.s32.totalorder %s20, 1
      %p185 = scmp.ne.s32.totalorder %s180, %s182
      %p186 = scmp.eq.s32.totalorder %s20, 0
      %p187 = por %p185, %p186
      %p188 = scmp.ne.s32.totalorder %s180, %s182
      %p189 = scmp.eq.s32.totalorder %s25, 1
      %p190 = por %p188, %p189
      %p191 = scmp.ne.s32.totalorder %s182, %s183
      %p192 = scmp.eq.s32.totalorder %s25, 0
      %p193 = por %p191, %p192
      %p194 = scmp.ne.s32.totalorder %s182, %s183
      %p195 = scmp.eq.s32.totalorder %s26, 1
      %p196 = por %p194, %p195
      %p198 = scmp.ne.s32.totalorder %s183, %s197
      %p199 = scmp.eq.s32.totalorder %s26, 0
      %p200 = por %p198, %p199
      %s202 = sadd.s32 %s201, 1
      %p205 = scmp.eq.s32.totalorder %s20, 1
      %p206 = scmp.ne.s32.totalorder %s201, %s203
      %p207 = scmp.eq.s32.totalorder %s20, 0
      %p208 = por %p206, %p207
      %p209 = scmp.ne.s32.totalorder %s201, %s203
      %p210 = scmp.eq.s32.totalorder %s25, 1
      %p211 = por %p209, %p210
      %p212 = scmp.ne.s32.totalorder %s203, %s204
      %p213 = scmp.eq.s32.totalorder %s25, 0
      %p214 = por %p212, %p213
      %p215 = scmp.ne.s32.totalorder %s203, %s204
      %p216 = scmp.eq.s32.totalorder %s26, 1
      %p217 = por %p215, %p216
      %p219 = scmp.ne.s32.totalorder %s204, %s218
      %p220 = scmp.eq.s32.totalorder %s26, 0
      %p221 = por %p219, %p220
      %s222 = ssub.s32 %s20, %s27
      %p223 = scmp.eq.s32.totalorder %s222, 0
      %s225 = sadd.s32 %s224, 1
      %s226 = scalar_select %p223, %s224, %s225
      %p229 = pneg %p223
      %p230 = scmp.eq.s32.totalorder %s20, 1
      %p231 = por %p229, %p230
      %p232 = scmp.ne.s32.totalorder %s224, %s227
      %p233 = scmp.eq.s32.totalorder %s20, 0
      %p234 = por %p232, %p233
      %p235 = scmp.ne.s32.totalorder %s224, %s227
      %p236 = scmp.eq.s32.totalorder %s25, 1
      %p237 = por %p235, %p236
      %p238 = scmp.ne.s32.totalorder %s227, %s228
      %p239 = scmp.eq.s32.totalorder %s25, 0
      %p240 = por %p238, %p239
      %p241 = scmp.ne.s32.totalorder %s227, %s228
      %p242 = scmp.eq.s32.totalorder %s26, 1
      %p243 = por %p241, %p242
      %p245 = scmp.ne.s32.totalorder %s228, %s244
      %p246 = scmp.eq.s32.totalorder %s26, 0
      %p247 = por %p245, %p246
      %p248 = scmp.le.s32.totalorder 1, %s20
      %p249 = scmp.lt.s32.totalorder %s20, 3
      %p250 = pnand %p248, %p249
      %p251 = pneg %p250
      // Predicated region
      $region9: #{tpu_custom_call.1} parent=5 // pred_check
        _
      $region10: #{tpu_custom_call.1} parent=5 // pred_check_branch
        %253 = sbr.rel (%p250) target = $region12
      $region11: #{tpu_custom_call.1} parent=5 // pred_region
        %s254 = ssub.s32 %s20, 1
        // Predicated region
        $region13: #{tpu_custom_call.1} parent=11 // pred_check
          %p255 = pneg %p67
        $region14: #{tpu_custom_call.1} parent=11 // pred_check_branch
          %257 = sbr.rel (%p255) target = $region16
        $region15: #{tpu_custom_call.1} parent=11 // pred_region
          _
        $region16: #{tpu_custom_call.1} parent=11 // pred_fallthru
          _
        // Predicated region
        $region17: #{tpu_custom_call.1} parent=11 // pred_check
          %p258 = pneg %p88
        $region18: #{tpu_custom_call.1} parent=11 // pred_check_branch
          %260 = sbr.rel (%p258) target = $region20
        $region19: #{tpu_custom_call.1} parent=11 // pred_region
          _
        $region20: #{tpu_custom_call.1} parent=11 // pred_fallthru
          _
        // Predicated region
        $region21: #{tpu_custom_call.1} parent=11 // pred_check
          %p261 = pneg %p109
        $region22: #{tpu_custom_call.1} parent=11 // pred_check_branch
          %263 = sbr.rel (%p261) target = $region24
        $region23: #{tpu_custom_call.1} parent=11 // pred_region
          _
        $region24: #{tpu_custom_call.1} parent=11 // pred_fallthru
          _
        // Predicated region
        $region25: #{tpu_custom_call.1} parent=11 // pred_check
          %p264 = pneg %p130
        $region26: #{tpu_custom_call.1} parent=11 // pred_check_branch
          %266 = sbr.rel (%p264) target = $region28
        $region27: #{tpu_custom_call.1} parent=11 // pred_region
          _
        $region28: #{tpu_custom_call.1} parent=11 // pred_fallthru
          _
        // Predicated region
        $region29: #{tpu_custom_call.1} parent=11 // pred_check
          %p267 = pneg %p151
        $region30: #{tpu_custom_call.1} parent=11 // pred_check_branch
          %269 = sbr.rel (%p267) target = $region32
        $region31: #{tpu_custom_call.1} parent=11 // pred_region
          _
        $region32: #{tpu_custom_call.1} parent=11 // pred_fallthru
          _
        // Predicated region
        $region33: #{tpu_custom_call.1} parent=11 // pred_check
          %p270 = pneg %p172
        $region34: #{tpu_custom_call.1} parent=11 // pred_check_branch
          %272 = sbr.rel (%p270) target = $region36
        $region35: #{tpu_custom_call.1} parent=11 // pred_region
          _
        $region36: #{tpu_custom_call.1} parent=11 // pred_fallthru
          _
        // Predicated region
        $region37: #{tpu_custom_call.1} parent=11 // pred_check
          %p273 = pneg %p193
        $region38: #{tpu_custom_call.1} parent=11 // pred_check_branch
          %275 = sbr.rel (%p273) target = $region40
        $region39: #{tpu_custom_call.1} parent=11 // pred_region
          _
        $region40: #{tpu_custom_call.1} parent=11 // pred_fallthru
          _
        // Predicated region
        $region41: #{tpu_custom_call.1} parent=11 // pred_check
          %p276 = pneg %p214
        $region42: #{tpu_custom_call.1} parent=11 // pred_check_branch
          %278 = sbr.rel (%p276) target = $region44
        $region43: #{tpu_custom_call.1} parent=11 // pred_region
          _
        $region44: #{tpu_custom_call.1} parent=11 // pred_fallthru
          _
      $region12: #{tpu_custom_call.1} parent=5 // pred_fallthru
        _
      %p279 = scmp.lt.s32.totalorder %s20, 2
      // Predicated region
      $region45: #{tpu_custom_call.1} parent=5 // pred_check
        %p280 = pneg %p279
      $region46: #{tpu_custom_call.1} parent=5 // pred_check_branch
        %282 = sbr.rel (%p280) target = $region48
      $region47: #{tpu_custom_call.1} parent=5 // pred_region
        // Predicated region
        $region49: #{tpu_custom_call.1} parent=47 // pred_check
          %p283 = pneg %p40
        $region50: #{tpu_custom_call.1} parent=47 // pred_check_branch
          %285 = sbr.rel (%p283) target = $region52
        $region51: #{tpu_custom_call.1} parent=47 // pred_region
          %s286 = smul.u32 32, %s20
          %p287 = scmp.lt.s32.totalorder %s286, 63
          %s288 = scalar_select %p287, %s286, 63
          %s289 = smul.addr %s288, 8
          %s290 = scalar_lea.vmem %s0, %s289
          %s291 = smul.u32 32, %s20
        $region52: #{tpu_custom_call.1} parent=47 // pred_fallthru
          _
      $region48: #{tpu_custom_call.1} parent=5 // pred_fallthru
        _
      %p292 = scmp.le.s32.totalorder 1, %s20
      %p293 = scmp.lt.s32.totalorder %s20, 3
      %p294 = pnand %p292, %p293
      %p295 = pneg %p294
      // Predicated region
      $region53: #{tpu_custom_call.1} parent=5 // pred_check
        _
      $region54: #{tpu_custom_call.1} parent=5 // pred_check_branch
        %297 = sbr.rel (%p294) target = $region56
      $region55: #{tpu_custom_call.1} parent=5 // pred_region
        %s298 = ssub.s32 %s20, 1
        %s299 = smul.u32 32, %s25
        %p300 = scmp.lt.s32.totalorder %s299, 63
        %s301 = scalar_select %p300, %s299, 63
        %s302 = smul.addr %s301, 8
        %s303 = scalar_lea.vmem %s0, %s302
        %p304 = pneg %p46
        %p305 = pneg %p43
        %p306 = pneg %p67
        %p307 = pneg %p64
        %p308 = pneg %p88
        %p309 = pneg %p85
        %p310 = pneg %p109
        %p311 = pneg %p106
        %p312 = pneg %p130
        %p313 = pneg %p127
        %p314 = pneg %p151
        %p315 = pneg %p148
        %p316 = pneg %p172
        %p317 = pneg %p169
        %p318 = pneg %p193
        %p319 = pneg %p190
        %p320 = pneg %p214
        %p321 = pneg %p211
        %p322 = pneg %p240
        %p323 = pneg %p237
        %s324 = sand.u32 %s227, 1
        %s325 = scalar_lea.sflag [#allocation4], %s324
        %s326 = sand.u32 %s227, 1
        %s327 = smul.addr %s326, 2
        %s328 = scalar_lea.vmem [#allocation3], %s327
        %s329 = smul.u32 32, %s25
        %p330 = scmp.lt.s32.totalorder %s329, 63
        %s331 = scalar_select %p330, %s329, 63
        %s332 = smul.addr %s331, 8
        %s333 = scalar_lea.vmem %s0, %s332
        %s334 = smul.u32 32, %s25
        %s335 = smul.u32 2, %s25
        %v336 = vld [vmem:[%s333] sm:$0xff]
        %v337 = vld [vmem:[%s333 + $0x8] sm:$0xff]
        %v338 = vld [vmem:[%s333 + $0x10] sm:$0xff]
        %v339 = vld [vmem:[%s333 + $0x18] sm:$0xff]
        %v340 = vld [vmem:[%s333 + $0x20] sm:$0xff]
        %v341 = vld [vmem:[%s333 + $0x28] sm:$0xff]
        %v342 = vld [vmem:[%s333 + $0x30] sm:$0xff]
        %v343 = vld [vmem:[%s333 + $0x38] sm:$0xff]
        %v344 = vld [vmem:[%s333 + $0x40] sm:$0xff]
        %v345 = vld [vmem:[%s333 + $0x48] sm:$0xff]
        %v346 = vld [vmem:[%s333 + $0x50] sm:$0xff]
        %v347 = vld [vmem:[%s333 + $0x58] sm:$0xff]
        %v348 = vld [vmem:[%s333 + $0x60] sm:$0xff]
        %v349 = vld [vmem:[%s333 + $0x68] sm:$0xff]
        %v350 = vld [vmem:[%s333 + $0x70] sm:$0xff]
        %v351 = vld [vmem:[%s333 + $0x78] sm:$0xff]
        %v352 = vld [vmem:[%s333 + $0x80] sm:$0xff]
        %v353 = vld [vmem:[%s333 + $0x88] sm:$0xff]
        %v354 = vld [vmem:[%s333 + $0x90] sm:$0xff]
        %v355 = vld [vmem:[%s333 + $0x98] sm:$0xff]
        %v356 = vld [vmem:[%s333 + $0xa0] sm:$0xff]
        %v357 = vld [vmem:[%s333 + $0xa8] sm:$0xff]
        %v358 = vld [vmem:[%s333 + $0xb0] sm:$0xff]
        %v359 = vld [vmem:[%s333 + $0xb8] sm:$0xff]
        %v360 = vld [vmem:[%s333 + $0xc0] sm:$0xff]
        %v361 = vld [vmem:[%s333 + $0xc8] sm:$0xff]
        %v362 = vld [vmem:[%s333 + $0xd0] sm:$0xff]
        %v363 = vld [vmem:[%s333 + $0xd8] sm:$0xff]
        %v364 = vld [vmem:[%s333 + $0xe0] sm:$0xff]
        %v365 = vld [vmem:[%s333 + $0xe8] sm:$0xff]
        %v366 = vld [vmem:[%s333 + $0xf0] sm:$0xff]
        %v367 = vld [vmem:[%s333 + $0xf8] sm:$0xff]
        %v368 = vld [vmem:[%s1] sm:$0xff]
        %v369 = vld [vmem:[%s1 + $0x8] sm:$0xff]
        %v370 = vld [vmem:[%s1 + $0x10] sm:$0xff]
        %v371 = vld [vmem:[%s1 + $0x18] sm:$0xff]
        %v372 = vld [vmem:[%s2] sm:$0x1]
        %v374 = vperm.slane %v372, 0
        %vm376 = vcmask 261120
        %v378 = vsel %vm376, %v336, 0
        %v381 = vsel %vm376, %v337, 0
        %v384 = vsel %vm376, %v338, 0
        %v387 = vsel %vm376, %v339, 0
        %v390 = vsel %vm376, %v340, 0
        %v393 = vsel %vm376, %v341, 0
        %v396 = vsel %vm376, %v342, 0
        %v399 = vsel %vm376, %v343, 0
        %v402 = vsel %vm376, %v344, 0
        %v405 = vsel %vm376, %v345, 0
        %v408 = vsel %vm376, %v346, 0
        %v411 = vsel %vm376, %v347, 0
        %v414 = vsel %vm376, %v348, 0
        %v417 = vsel %vm376, %v349, 0
        %v420 = vsel %vm376, %v350, 0
        %v423 = vsel %vm376, %v351, 0
        %v426 = vsel %vm376, %v352, 0
        %v429 = vsel %vm376, %v353, 0
        %v432 = vsel %vm376, %v354, 0
        %v435 = vsel %vm376, %v355, 0
        %v438 = vsel %vm376, %v356, 0
        %v441 = vsel %vm376, %v357, 0
        %v444 = vsel %vm376, %v358, 0
        %v447 = vsel %vm376, %v359, 0
        %v450 = vsel %vm376, %v360, 0
        %v453 = vsel %vm376, %v361, 0
        %v456 = vsel %vm376, %v362, 0
        %v459 = vsel %vm376, %v363, 0
        %v462 = vsel %vm376, %v364, 0
        %v465 = vsel %vm376, %v365, 0
        %v468 = vsel %vm376, %v366, 0
        %v471 = vsel %vm376, %v367, 0
        %473 = vmatpush.msra.mxu0 0.0
        %474 = vmatpush.msra.mxu0 0.0
        %475 = vmatpush.msra.mxu0 0.0
        %476 = vmatpush.msra.mxu0 0.0
        %477 = vmatpush.msra.mxu0 0.0
        %478 = vmatpush.msra.mxu0 0.0
        %479 = vmatpush.msra.mxu0 0.0
        %480 = vmatpush.msra.mxu0 0.0
        %481 = vmatpush.msra.mxu0 0.0
        %482 = vmatpush.msra.mxu0 0.0
        %483 = vmatpush.msra.mxu0 0.0
        %484 = vmatpush.msra.mxu0 0.0
        %485 = vmatpush.msra.mxu0 %v371
        %486 = vmatpush.msra.mxu0 %v370
        %487 = vmatpush.msra.mxu0 %v369
        %488 = vmatpush.msra.mxu0 %v368
        %489 = vmatmul.f32.gmra.mxu0 %v378
        %v490 = vpop.f32.mrf.mxu0
        %v491 = vadd.f32 %v374, %v490
        %492 = vmatmul.f32.gmra.mxu0 %v381
        %v493 = vpop.f32.mrf.mxu0
        %v494 = vadd.f32 %v374, %v493
        %495 = vmatmul.f32.gmra.mxu0 %v384
        %v496 = vpop.f32.mrf.mxu0
        %v497 = vadd.f32 %v374, %v496
        %498 = vmatmul.f32.gmra.mxu0 %v387
        %v499 = vpop.f32.mrf.mxu0
        %v500 = vadd.f32 %v374, %v499
        %501 = vmatmul.f32.gmra.mxu0 %v390
        %v502 = vpop.f32.mrf.mxu0
        %v503 = vadd.f32 %v374, %v502
        %504 = vmatmul.f32.gmra.mxu0 %v393
        %v505 = vpop.f32.mrf.mxu0
        %v506 = vadd.f32 %v374, %v505
        %507 = vmatmul.f32.gmra.mxu0 %v396
        %v508 = vpop.f32.mrf.mxu0
        %v509 = vadd.f32 %v374, %v508
        %510 = vmatmul.f32.gmra.mxu0 %v399
        %v511 = vpop.f32.mrf.mxu0
        %v512 = vadd.f32 %v374, %v511
        %513 = vmatmul.f32.gmra.mxu0 %v402
        %v514 = vpop.f32.mrf.mxu0
        %v515 = vadd.f32 %v374, %v514
        %516 = vmatmul.f32.gmra.mxu0 %v405
        %v517 = vpop.f32.mrf.mxu0
        %v518 = vadd.f32 %v374, %v517
        %519 = vmatmul.f32.gmra.mxu0 %v408
        %v520 = vpop.f32.mrf.mxu0
        %v521 = vadd.f32 %v374, %v520
        %522 = vmatmul.f32.gmra.mxu0 %v411
        %v523 = vpop.f32.mrf.mxu0
        %v524 = vadd.f32 %v374, %v523
        %525 = vmatmul.f32.gmra.mxu0 %v414
        %v526 = vpop.f32.mrf.mxu0
        %v527 = vadd.f32 %v374, %v526
        %528 = vmatmul.f32.gmra.mxu0 %v417
        %v529 = vpop.f32.mrf.mxu0
        %v530 = vadd.f32 %v374, %v529
        %531 = vmatmul.f32.gmra.mxu0 %v420
        %v532 = vpop.f32.mrf.mxu0
        %v533 = vadd.f32 %v374, %v532
        %534 = vmatmul.f32.gmra.mxu0 %v423
        %v535 = vpop.f32.mrf.mxu0
        %v536 = vadd.f32 %v374, %v535
        %537 = vmatmul.f32.gmra.mxu0 %v426
        %v538 = vpop.f32.mrf.mxu0
        %v539 = vadd.f32 %v374, %v538
        %540 = vmatmul.f32.gmra.mxu0 %v429
        %v541 = vpop.f32.mrf.mxu0
        %v542 = vadd.f32 %v374, %v541
        %543 = vmatmul.f32.gmra.mxu0 %v432
        %v544 = vpop.f32.mrf.mxu0
        %v545 = vadd.f32 %v374, %v544
        %546 = vmatmul.f32.gmra.mxu0 %v435
        %v547 = vpop.f32.mrf.mxu0
        %v548 = vadd.f32 %v374, %v547
        %549 = vmatmul.f32.gmra.mxu0 %v438
        %v550 = vpop.f32.mrf.mxu0
        %v551 = vadd.f32 %v374, %v550
        %552 = vmatmul.f32.gmra.mxu0 %v441
        %v553 = vpop.f32.mrf.mxu0
        %v554 = vadd.f32 %v374, %v553
        %555 = vmatmul.f32.gmra.mxu0 %v444
        %v556 = vpop.f32.mrf.mxu0
        %v557 = vadd.f32 %v374, %v556
        %558 = vmatmul.f32.gmra.mxu0 %v447
        %v559 = vpop.f32.mrf.mxu0
        %v560 = vadd.f32 %v374, %v559
        %561 = vmatmul.f32.gmra.mxu0 %v450
        %v562 = vpop.f32.mrf.mxu0
        %v563 = vadd.f32 %v374, %v562
        %564 = vmatmul.f32.gmra.mxu0 %v453
        %v565 = vpop.f32.mrf.mxu0
        %v566 = vadd.f32 %v374, %v565
        %567 = vmatmul.f32.gmra.mxu0 %v456
        %v568 = vpop.f32.mrf.mxu0
        %v569 = vadd.f32 %v374, %v568
        %570 = vmatmul.f32.gmra.mxu0 %v459
        %v571 = vpop.f32.mrf.mxu0
        %v572 = vadd.f32 %v374, %v571
        %573 = vmatmul.f32.gmra.mxu0 %v462
        %v574 = vpop.f32.mrf.mxu0
        %v575 = vadd.f32 %v374, %v574
        %576 = vmatmul.f32.gmra.mxu0 %v465
        %v577 = vpop.f32.mrf.mxu0
        %v578 = vadd.f32 %v374, %v577
        %579 = vmatmul.f32.gmra.mxu0 %v468
        %v580 = vpop.f32.mrf.mxu0
        %v581 = vadd.f32 %v374, %v580
        %582 = vmatmul.f32.gmra.mxu0 %v471
        %v583 = vpop.f32.mrf.mxu0
        %v584 = vadd.f32 %v374, %v583
        %585 = vdwg.mxu0
        %v586 = vmax.f32 %v491, 0.0
        %v587 = vmax.f32 %v494, 0.0
        %v588 = vmax.f32 %v497, 0.0
        %v589 = vmax.f32 %v500, 0.0
        %v590 = vmax.f32 %v503, 0.0
        %v591 = vmax.f32 %v506, 0.0
        %v592 = vmax.f32 %v509, 0.0
        %v593 = vmax.f32 %v512, 0.0
        %v594 = vmax.f32 %v515, 0.0
        %v595 = vmax.f32 %v518, 0.0
        %v596 = vmax.f32 %v521, 0.0
        %v597 = vmax.f32 %v524, 0.0
        %v598 = vmax.f32 %v527, 0.0
        %v599 = vmax.f32 %v530, 0.0
        %v600 = vmax.f32 %v533, 0.0
        %v601 = vmax.f32 %v536, 0.0
        %v602 = vmax.f32 %v539, 0.0
        %v603 = vmax.f32 %v542, 0.0
        %v604 = vmax.f32 %v545, 0.0
        %v605 = vmax.f32 %v548, 0.0
        %v606 = vmax.f32 %v551, 0.0
        %v607 = vmax.f32 %v554, 0.0
        %v608 = vmax.f32 %v557, 0.0
        %v609 = vmax.f32 %v560, 0.0
        %v610 = vmax.f32 %v563, 0.0
        %v611 = vmax.f32 %v566, 0.0
        %v612 = vmax.f32 %v569, 0.0
        %v613 = vmax.f32 %v572, 0.0
        %v614 = vmax.f32 %v575, 0.0
        %v615 = vmax.f32 %v578, 0.0
        %v616 = vmax.f32 %v581, 0.0
        %v617 = vmax.f32 %v584, 0.0
        %v618 = vld [vmem:[%s3] sm:$0xff]
        %v619 = vld [vmem:[%s3 + $0x8] sm:$0xff]
        %v620 = vld [vmem:[%s3 + $0x10] sm:$0xff]
        %v621 = vld [vmem:[%s3 + $0x18] sm:$0xff]
        %v622 = vld [vmem:[%s3 + $0x20] sm:$0xff]
        %v623 = vld [vmem:[%s3 + $0x28] sm:$0xff]
        %v624 = vld [vmem:[%s3 + $0x30] sm:$0xff]
        %v625 = vld [vmem:[%s3 + $0x38] sm:$0xff]
        %v626 = vld [vmem:[%s3 + $0x40] sm:$0xff]
        %v627 = vld [vmem:[%s3 + $0x48] sm:$0xff]
        %v628 = vld [vmem:[%s3 + $0x50] sm:$0xff]
        %v629 = vld [vmem:[%s3 + $0x58] sm:$0xff]
        %v630 = vld [vmem:[%s3 + $0x60] sm:$0xff]
        %v631 = vld [vmem:[%s3 + $0x68] sm:$0xff]
        %v632 = vld [vmem:[%s3 + $0x70] sm:$0xff]
        %v633 = vld [vmem:[%s3 + $0x78] sm:$0xff]
        %v634 = vld [vmem:[%s4] sm:$0x1]
        %v636 = vperm.slane %v634, 0
        %638 = vmatpush.msra.mxu0 %v633
        %639 = vmatpush.msra.mxu0 %v632
        %640 = vmatpush.msra.mxu0 %v631
        %641 = vmatpush.msra.mxu0 %v630
        %642 = vmatpush.msra.mxu0 %v629
        %643 = vmatpush.msra.mxu0 %v628
        %644 = vmatpush.msra.mxu0 %v627
        %645 = vmatpush.msra.mxu0 %v626
        %646 = vmatpush.msra.mxu0 %v625
        %647 = vmatpush.msra.mxu0 %v624
        %648 = vmatpush.msra.mxu0 %v623
        %649 = vmatpush.msra.mxu0 %v622
        %650 = vmatpush.msra.mxu0 %v621
        %651 = vmatpush.msra.mxu0 %v620
        %652 = vmatpush.msra.mxu0 %v619
        %653 = vmatpush.msra.mxu0 %v618
        %654 = vmatmul.f32.gmra.mxu0 %v586
        %v655 = vpop.f32.mrf.mxu0
        %v656 = vadd.f32 %v636, %v655
        %657 = vmatmul.f32.gmra.mxu0 %v587
        %v658 = vpop.f32.mrf.mxu0
        %v659 = vadd.f32 %v636, %v658
        %660 = vmatmul.f32.gmra.mxu0 %v588
        %v661 = vpop.f32.mrf.mxu0
        %v662 = vadd.f32 %v636, %v661
        %663 = vmatmul.f32.gmra.mxu0 %v589
        %v664 = vpop.f32.mrf.mxu0
        %v665 = vadd.f32 %v636, %v664
        %666 = vmatmul.f32.gmra.mxu0 %v590
        %v667 = vpop.f32.mrf.mxu0
        %v668 = vadd.f32 %v636, %v667
        %669 = vmatmul.f32.gmra.mxu0 %v591
        %v670 = vpop.f32.mrf.mxu0
        %v671 = vadd.f32 %v636, %v670
        %672 = vmatmul.f32.gmra.mxu0 %v592
        %v673 = vpop.f32.mrf.mxu0
        %v674 = vadd.f32 %v636, %v673
        %675 = vmatmul.f32.gmra.mxu0 %v593
        %v676 = vpop.f32.mrf.mxu0
        %v677 = vadd.f32 %v636, %v676
        %678 = vmatmul.f32.gmra.mxu0 %v594
        %v679 = vpop.f32.mrf.mxu0
        %v680 = vadd.f32 %v636, %v679
        %681 = vmatmul.f32.gmra.mxu0 %v595
        %v682 = vpop.f32.mrf.mxu0
        %v683 = vadd.f32 %v636, %v682
        %684 = vmatmul.f32.gmra.mxu0 %v596
        %v685 = vpop.f32.mrf.mxu0
        %v686 = vadd.f32 %v636, %v685
        %687 = vmatmul.f32.gmra.mxu0 %v597
        %v688 = vpop.f32.mrf.mxu0
        %v689 = vadd.f32 %v636, %v688
        %690 = vmatmul.f32.gmra.mxu0 %v598
        %v691 = vpop.f32.mrf.mxu0
        %v692 = vadd.f32 %v636, %v691
        %693 = vmatmul.f32.gmra.mxu0 %v599
        %v694 = vpop.f32.mrf.mxu0
        %v695 = vadd.f32 %v636, %v694
        %696 = vmatmul.f32.gmra.mxu0 %v600
        %v697 = vpop.f32.mrf.mxu0
        %v698 = vadd.f32 %v636, %v697
        %699 = vmatmul.f32.gmra.mxu0 %v601
        %v700 = vpop.f32.mrf.mxu0
        %v701 = vadd.f32 %v636, %v700
        %702 = vmatmul.f32.gmra.mxu0 %v602
        %v703 = vpop.f32.mrf.mxu0
        %v704 = vadd.f32 %v636, %v703
        %705 = vmatmul.f32.gmra.mxu0 %v603
        %v706 = vpop.f32.mrf.mxu0
        %v707 = vadd.f32 %v636, %v706
        %708 = vmatmul.f32.gmra.mxu0 %v604
        %v709 = vpop.f32.mrf.mxu0
        %v710 = vadd.f32 %v636, %v709
        %711 = vmatmul.f32.gmra.mxu0 %v605
        %v712 = vpop.f32.mrf.mxu0
        %v713 = vadd.f32 %v636, %v712
        %714 = vmatmul.f32.gmra.mxu0 %v606
        %v715 = vpop.f32.mrf.mxu0
        %v716 = vadd.f32 %v636, %v715
        %717 = vmatmul.f32.gmra.mxu0 %v607
        %v718 = vpop.f32.mrf.mxu0
        %v719 = vadd.f32 %v636, %v718
        %720 = vmatmul.f32.gmra.mxu0 %v608
        %v721 = vpop.f32.mrf.mxu0
        %v722 = vadd.f32 %v636, %v721
        %723 = vmatmul.f32.gmra.mxu0 %v609
        %v724 = vpop.f32.mrf.mxu0
        %v725 = vadd.f32 %v636, %v724
        %726 = vmatmul.f32.gmra.mxu0 %v610
        %v727 = vpop.f32.mrf.mxu0
        %v728 = vadd.f32 %v636, %v727
        %729 = vmatmul.f32.gmra.mxu0 %v611
        %v730 = vpop.f32.mrf.mxu0
        %v731 = vadd.f32 %v636, %v730
        %732 = vmatmul.f32.gmra.mxu0 %v612
        %v733 = vpop.f32.mrf.mxu0
        %v734 = vadd.f32 %v636, %v733
        %735 = vmatmul.f32.gmra.mxu0 %v613
        %v736 = vpop.f32.mrf.mxu0
        %v737 = vadd.f32 %v636, %v736
        %738 = vmatmul.f32.gmra.mxu0 %v614
        %v739 = vpop.f32.mrf.mxu0
        %v740 = vadd.f32 %v636, %v739
        %741 = vmatmul.f32.gmra.mxu0 %v615
        %v742 = vpop.f32.mrf.mxu0
        %v743 = vadd.f32 %v636, %v742
        %744 = vmatmul.f32.gmra.mxu0 %v616
        %v745 = vpop.f32.mrf.mxu0
        %v746 = vadd.f32 %v636, %v745
        %747 = vmatmul.f32.gmra.mxu0 %v617
        %v748 = vpop.f32.mrf.mxu0
        %v749 = vadd.f32 %v636, %v748
        %750 = vdwg.mxu0
        %v751 = vmax.f32 %v656, 0.0
        %v752 = vmax.f32 %v659, 0.0
        %v753 = vmax.f32 %v662, 0.0
        %v754 = vmax.f32 %v665, 0.0
        %v755 = vmax.f32 %v668, 0.0
        %v756 = vmax.f32 %v671, 0.0
        %v757 = vmax.f32 %v674, 0.0
        %v758 = vmax.f32 %v677, 0.0
        %v759 = vmax.f32 %v680, 0.0
        %v760 = vmax.f32 %v683, 0.0
        %v761 = vmax.f32 %v686, 0.0
        %v762 = vmax.f32 %v689, 0.0
        %v763 = vmax.f32 %v692, 0.0
        %v764 = vmax.f32 %v695, 0.0
        %v765 = vmax.f32 %v698, 0.0
        %v766 = vmax.f32 %v701, 0.0
        %v767 = vmax.f32 %v704, 0.0
        %v768 = vmax.f32 %v707, 0.0
        %v769 = vmax.f32 %v710, 0.0
        %v770 = vmax.f32 %v713, 0.0
        %v771 = vmax.f32 %v716, 0.0
        %v772 = vmax.f32 %v719, 0.0
        %v773 = vmax.f32 %v722, 0.0
        %v774 = vmax.f32 %v725, 0.0
        %v775 = vmax.f32 %v728, 0.0
        %v776 = vmax.f32 %v731, 0.0
        %v777 = vmax.f32 %v734, 0.0
        %v778 = vmax.f32 %v737, 0.0
        %v779 = vmax.f32 %v740, 0.0
        %v780 = vmax.f32 %v743, 0.0
        %v781 = vmax.f32 %v746, 0.0
        %v782 = vmax.f32 %v749, 0.0
        %v783 = vld [vmem:[%s5] sm:$0xff]
        %v784 = vld [vmem:[%s5 + $0x8] sm:$0xff]
        %v785 = vld [vmem:[%s5 + $0x10] sm:$0xff]
        %v786 = vld [vmem:[%s5 + $0x18] sm:$0xff]
        %v787 = vld [vmem:[%s5 + $0x20] sm:$0xff]
        %v788 = vld [vmem:[%s5 + $0x28] sm:$0xff]
        %v789 = vld [vmem:[%s5 + $0x30] sm:$0xff]
        %v790 = vld [vmem:[%s5 + $0x38] sm:$0xff]
        %v791 = vld [vmem:[%s6] sm:$0x1]
        %v793 = vperm.slane %v791, 0
        %vm795 = vcmask 523264
        %v797 = vsel %vm795, %v751, 0
        %v800 = vsel %vm795, %v752, 0
        %v803 = vsel %vm795, %v753, 0
        %v806 = vsel %vm795, %v754, 0
        %v809 = vsel %vm795, %v755, 0
        %v812 = vsel %vm795, %v756, 0
        %v815 = vsel %vm795, %v757, 0
        %v818 = vsel %vm795, %v758, 0
        %v821 = vsel %vm795, %v759, 0
        %v824 = vsel %vm795, %v760, 0
        %v827 = vsel %vm795, %v761, 0
        %v830 = vsel %vm795, %v762, 0
        %v833 = vsel %vm795, %v763, 0
        %v836 = vsel %vm795, %v764, 0
        %v839 = vsel %vm795, %v765, 0
        %v842 = vsel %vm795, %v766, 0
        %v845 = vsel %vm795, %v767, 0
        %v848 = vsel %vm795, %v768, 0
        %v851 = vsel %vm795, %v769, 0
        %v854 = vsel %vm795, %v770, 0
        %v857 = vsel %vm795, %v771, 0
        %v860 = vsel %vm795, %v772, 0
        %v863 = vsel %vm795, %v773, 0
        %v866 = vsel %vm795, %v774, 0
        %v869 = vsel %vm795, %v775, 0
        %v872 = vsel %vm795, %v776, 0
        %v875 = vsel %vm795, %v777, 0
        %v878 = vsel %vm795, %v778, 0
        %v881 = vsel %vm795, %v779, 0
        %v884 = vsel %vm795, %v780, 0
        %v887 = vsel %vm795, %v781, 0
        %v890 = vsel %vm795, %v782, 0
        %892 = vmatpush.msra.mxu0 0.0
        %893 = vmatpush.msra.mxu0 0.0
        %894 = vmatpush.msra.mxu0 0.0
        %895 = vmatpush.msra.mxu0 0.0
        %896 = vmatpush.msra.mxu0 0.0
        %897 = vmatpush.msra.mxu0 0.0
        %898 = vmatpush.msra.mxu0 0.0
        %899 = vmatpush.msra.mxu0 0.0
        %900 = vmatpush.msra.mxu0 %v790
        %901 = vmatpush.msra.mxu0 %v789
        %902 = vmatpush.msra.mxu0 %v788
        %903 = vmatpush.msra.mxu0 %v787
        %904 = vmatpush.msra.mxu0 %v786
        %905 = vmatpush.msra.mxu0 %v785
        %906 = vmatpush.msra.mxu0 %v784
        %907 = vmatpush.msra.mxu0 %v783
        %908 = vmatmul.f32.gmra.mxu0 %v797
        %v909 = vpop.f32.mrf.mxu0
        %v910 = vadd.f32 %v793, %v909
        %911 = vmatmul.f32.gmra.mxu0 %v800
        %v912 = vpop.f32.mrf.mxu0
        %v913 = vadd.f32 %v793, %v912
        %914 = vmatmul.f32.gmra.mxu0 %v803
        %v915 = vpop.f32.mrf.mxu0
        %v916 = vadd.f32 %v793, %v915
        %917 = vmatmul.f32.gmra.mxu0 %v806
        %v918 = vpop.f32.mrf.mxu0
        %v919 = vadd.f32 %v793, %v918
        %920 = vmatmul.f32.gmra.mxu0 %v809
        %v921 = vpop.f32.mrf.mxu0
        %v922 = vadd.f32 %v793, %v921
        %923 = vmatmul.f32.gmra.mxu0 %v812
        %v924 = vpop.f32.mrf.mxu0
        %v925 = vadd.f32 %v793, %v924
        %926 = vmatmul.f32.gmra.mxu0 %v815
        %v927 = vpop.f32.mrf.mxu0
        %v928 = vadd.f32 %v793, %v927
        %929 = vmatmul.f32.gmra.mxu0 %v818
        %v930 = vpop.f32.mrf.mxu0
        %v931 = vadd.f32 %v793, %v930
        %932 = vmatmul.f32.gmra.mxu0 %v821
        %v933 = vpop.f32.mrf.mxu0
        %v934 = vadd.f32 %v793, %v933
        %935 = vmatmul.f32.gmra.mxu0 %v824
        %v936 = vpop.f32.mrf.mxu0
        %v937 = vadd.f32 %v793, %v936
        %938 = vmatmul.f32.gmra.mxu0 %v827
        %v939 = vpop.f32.mrf.mxu0
        %v940 = vadd.f32 %v793, %v939
        %941 = vmatmul.f32.gmra.mxu0 %v830
        %v942 = vpop.f32.mrf.mxu0
        %v943 = vadd.f32 %v793, %v942
        %944 = vmatmul.f32.gmra.mxu0 %v833
        %v945 = vpop.f32.mrf.mxu0
        %v946 = vadd.f32 %v793, %v945
        %947 = vmatmul.f32.gmra.mxu0 %v836
        %v948 = vpop.f32.mrf.mxu0
        %v949 = vadd.f32 %v793, %v948
        %950 = vmatmul.f32.gmra.mxu0 %v839
        %v951 = vpop.f32.mrf.mxu0
        %v952 = vadd.f32 %v793, %v951
        %953 = vmatmul.f32.gmra.mxu0 %v842
        %v954 = vpop.f32.mrf.mxu0
        %v955 = vadd.f32 %v793, %v954
        %956 = vmatmul.f32.gmra.mxu0 %v845
        %v957 = vpop.f32.mrf.mxu0
        %v958 = vadd.f32 %v793, %v957
        %959 = vmatmul.f32.gmra.mxu0 %v848
        %v960 = vpop.f32.mrf.mxu0
        %v961 = vadd.f32 %v793, %v960
        %962 = vmatmul.f32.gmra.mxu0 %v851
        %v963 = vpop.f32.mrf.mxu0
        %v964 = vadd.f32 %v793, %v963
        %965 = vmatmul.f32.gmra.mxu0 %v854
        %v966 = vpop.f32.mrf.mxu0
        %v967 = vadd.f32 %v793, %v966
        %968 = vmatmul.f32.gmra.mxu0 %v857
        %v969 = vpop.f32.mrf.mxu0
        %v970 = vadd.f32 %v793, %v969
        %971 = vmatmul.f32.gmra.mxu0 %v860
        %v972 = vpop.f32.mrf.mxu0
        %v973 = vadd.f32 %v793, %v972
        %974 = vmatmul.f32.gmra.mxu0 %v863
        %v975 = vpop.f32.mrf.mxu0
        %v976 = vadd.f32 %v793, %v975
        %977 = vmatmul.f32.gmra.mxu0 %v866
        %v978 = vpop.f32.mrf.mxu0
        %v979 = vadd.f32 %v793, %v978
        %980 = vmatmul.f32.gmra.mxu0 %v869
        %v981 = vpop.f32.mrf.mxu0
        %v982 = vadd.f32 %v793, %v981
        %983 = vmatmul.f32.gmra.mxu0 %v872
        %v984 = vpop.f32.mrf.mxu0
        %v985 = vadd.f32 %v793, %v984
        %986 = vmatmul.f32.gmra.mxu0 %v875
        %v987 = vpop.f32.mrf.mxu0
        %v988 = vadd.f32 %v793, %v987
        %989 = vmatmul.f32.gmra.mxu0 %v878
        %v990 = vpop.f32.mrf.mxu0
        %v991 = vadd.f32 %v793, %v990
        %992 = vmatmul.f32.gmra.mxu0 %v881
        %v993 = vpop.f32.mrf.mxu0
        %v994 = vadd.f32 %v793, %v993
        %995 = vmatmul.f32.gmra.mxu0 %v884
        %v996 = vpop.f32.mrf.mxu0
        %v997 = vadd.f32 %v793, %v996
        %998 = vmatmul.f32.gmra.mxu0 %v887
        %v999 = vpop.f32.mrf.mxu0
        %v1000 = vadd.f32 %v793, %v999
        %1001 = vmatmul.f32.gmra.mxu0 %v890
        %v1002 = vpop.f32.mrf.mxu0
        %v1003 = vadd.f32 %v793, %v1002
        %1004 = vdwg.mxu0
        %v1005 = vmax.f32 %v910, 0.0
        %v1006 = vmax.f32 %v913, 0.0
        %v1007 = vmax.f32 %v916, 0.0
        %v1008 = vmax.f32 %v919, 0.0
        %v1009 = vmax.f32 %v922, 0.0
        %v1010 = vmax.f32 %v925, 0.0
        %v1011 = vmax.f32 %v928, 0.0
        %v1012 = vmax.f32 %v931, 0.0
        %v1013 = vmax.f32 %v934, 0.0
        %v1014 = vmax.f32 %v937, 0.0
        %v1015 = vmax.f32 %v940, 0.0
        %v1016 = vmax.f32 %v943, 0.0
        %v1017 = vmax.f32 %v946, 0.0
        %v1018 = vmax.f32 %v949, 0.0
        %v1019 = vmax.f32 %v952, 0.0
        %v1020 = vmax.f32 %v955, 0.0
        %v1021 = vmax.f32 %v958, 0.0
        %v1022 = vmax.f32 %v961, 0.0
        %v1023 = vmax.f32 %v964, 0.0
        %v1024 = vmax.f32 %v967, 0.0
        %v1025 = vmax.f32 %v970, 0.0
        %v1026 = vmax.f32 %v973, 0.0
        %v1027 = vmax.f32 %v976, 0.0
        %v1028 = vmax.f32 %v979, 0.0
        %v1029 = vmax.f32 %v982, 0.0
        %v1030 = vmax.f32 %v985, 0.0
        %v1031 = vmax.f32 %v988, 0.0
        %v1032 = vmax.f32 %v991, 0.0
        %v1033 = vmax.f32 %v994, 0.0
        %v1034 = vmax.f32 %v997, 0.0
        %v1035 = vmax.f32 %v1000, 0.0
        %v1036 = vmax.f32 %v1003, 0.0
        %v1037 = vld [vmem:[%s7] sm:$0x1]
        %v1038 = vld [vmem:[#allocation2] sm:$0x1]
        %1040 = vset.pattern.permute.xlu0 0
        %1041 = vperm.xlu0 %1040, %v1038
        %v1042 = vpop.permute.xlu0 %1041
        %v1044 = vperm.slane %v1042, 0
        %v1046 = vsel %vm376, %v1037, 0
        %v1049 = vsel %vm376, %v1005, 0
        %v1052 = vsel %vm376, %v1006, 0
        %v1055 = vsel %vm376, %v1007, 0
        %v1058 = vsel %vm376, %v1008, 0
        %v1061 = vsel %vm376, %v1009, 0
        %v1064 = vsel %vm376, %v1010, 0
        %v1067 = vsel %vm376, %v1011, 0
        %v1070 = vsel %vm376, %v1012, 0
        %v1073 = vsel %vm376, %v1013, 0
        %v1076 = vsel %vm376, %v1014, 0
        %v1079 = vsel %vm376, %v1015, 0
        %v1082 = vsel %vm376, %v1016, 0
        %v1085 = vsel %vm376, %v1017, 0
        %v1088 = vsel %vm376, %v1018, 0
        %v1091 = vsel %vm376, %v1019, 0
        %v1094 = vsel %vm376, %v1020, 0
        %v1097 = vsel %vm376, %v1021, 0
        %v1100 = vsel %vm376, %v1022, 0
        %v1103 = vsel %vm376, %v1023, 0
        %v1106 = vsel %vm376, %v1024, 0
        %v1109 = vsel %vm376, %v1025, 0
        %v1112 = vsel %vm376, %v1026, 0
        %v1115 = vsel %vm376, %v1027, 0
        %v1118 = vsel %vm376, %v1028, 0
        %v1121 = vsel %vm376, %v1029, 0
        %v1124 = vsel %vm376, %v1030, 0
        %v1127 = vsel %vm376, %v1031, 0
        %v1130 = vsel %vm376, %v1032, 0
        %v1133 = vsel %vm376, %v1033, 0
        %v1136 = vsel %vm376, %v1034, 0
        %v1139 = vsel %vm376, %v1035, 0
        %v1142 = vsel %vm376, %v1036, 0
        %1144 = vmatpush.xpose.msra.mxu0 %v1094
        %1145 = vmatpush.xpose.msra.mxu0 %v1091
        %1146 = vmatpush.xpose.msra.mxu0 %v1088
        %1147 = vmatpush.xpose.msra.mxu0 %v1085
        %1148 = vmatpush.xpose.msra.mxu0 %v1082
        %1149 = vmatpush.xpose.msra.mxu0 %v1079
        %1150 = vmatpush.xpose.msra.mxu0 %v1076
        %1151 = vmatpush.xpose.msra.mxu0 %v1073
        %1152 = vmatpush.xpose.msra.mxu0 %v1070
        %1153 = vmatpush.xpose.msra.mxu0 %v1067
        %1154 = vmatpush.xpose.msra.mxu0 %v1064
        %1155 = vmatpush.xpose.msra.mxu0 %v1061
        %1156 = vmatpush.xpose.msra.mxu0 %v1058
        %1157 = vmatpush.xpose.msra.mxu0 %v1055
        %1158 = vmatpush.xpose.msra.mxu0 %v1052
        %1159 = vmatpush.xpose.msra.mxu0 %v1049
        %1160 = vmatmul.f32.gmra.mxu0 %v1046
        %v1161 = vpop.f32.mrf.mxu0
        %v1162 = vadd.f32 %v1044, %v1161
        %1163 = vdwg.mxu0
        %1164 = vmatpush.xpose.msra.mxu0 %v1142
        %1165 = vmatpush.xpose.msra.mxu0 %v1139
        %1166 = vmatpush.xpose.msra.mxu0 %v1136
        %1167 = vmatpush.xpose.msra.mxu0 %v1133
        %1168 = vmatpush.xpose.msra.mxu0 %v1130
        %1169 = vmatpush.xpose.msra.mxu0 %v1127
        %1170 = vmatpush.xpose.msra.mxu0 %v1124
        %1171 = vmatpush.xpose.msra.mxu0 %v1121
        %1172 = vmatpush.xpose.msra.mxu0 %v1118
        %1173 = vmatpush.xpose.msra.mxu0 %v1115
        %1174 = vmatpush.xpose.msra.mxu0 %v1112
        %1175 = vmatpush.xpose.msra.mxu0 %v1109
        %1176 = vmatpush.xpose.msra.mxu0 %v1106
        %1177 = vmatpush.xpose.msra.mxu0 %v1103
        %1178 = vmatpush.xpose.msra.mxu0 %v1100
        %1179 = vmatpush.xpose.msra.mxu0 %v1097
        %1180 = vmatmul.f32.gmra.mxu0 %v1046
        %v1181 = vpop.f32.mrf.mxu0
        %v1182 = vadd.f32 %v1044, %v1181
        %1183 = vdwg.mxu0
        %v1186 = vrot.slane %v1182, 7
        %vm1187 = vcmask 1040384
        %v1188 = vsel %vm1187, %v1162, %v1186
        %v1190 = vlaneseq
        %vm1191 = vcmp.ge.s32.totalorder %v1190, 0
        %vm1192 = vcmp.lt.s32.totalorder %v1190, 256
        %vm1193 = vmand %vm1191, %vm1192
        %1194 = vst.msk [vmem:[%s328] sm:$0x3] %vm1193, %v1188
        %s1195 = sand.u32 %s227, 1
        %s1196 = scalar_lea.sflag [#allocation4], %s1195
        %s1197 = sand.u32 %s227, 1
        %s1198 = smul.addr %s1197, 2
        %s1199 = scalar_lea.vmem [#allocation3], %s1198
        // Predicated region
        $region57: #{tpu_custom_call.1} parent=55 // pred_check
          %p1200 = pneg %p237
        $region58: #{tpu_custom_call.1} parent=55 // pred_check_branch
          %1202 = sbr.rel (%p1200) target = $region60
        $region59: #{tpu_custom_call.1} parent=55 // pred_region
          %s1203 = smul.u32 2, %s25
          %1205 = vsyncadd %s1196, 0
          %s1206 = scalar_lea.hbm %s9, %s1203
          %s1208 = sshll.u32 %s1199, 4
          %s1209 = int_to_ptr.vmem [resolvable:$true] %s1208
          %s1210 = sshll.u32 %s1206, 4
          %s1211 = int_to_ptr.hbm [resolvable:$true] %s1210
          %1213 = dma.vmem_to_hbm [thread:$0]  %s1209, 32, %s1211, %s1196
        $region60: #{tpu_custom_call.1} parent=55 // pred_fallthru
          _
      $region56: #{tpu_custom_call.1} parent=5 // pred_fallthru
        _
      %p1214 = scmp.le.s32.totalorder 2, %s20
      // Predicated region
      $region61: #{tpu_custom_call.1} parent=5 // pred_check
        %p1215 = pneg %p1214
      $region62: #{tpu_custom_call.1} parent=5 // pred_check_branch
        %1217 = sbr.rel (%p1215) target = $region64
      $region63: #{tpu_custom_call.1} parent=5 // pred_region
        %s1218 = ssub.s32 %s20, 2
        // Predicated region
        $region65: #{tpu_custom_call.1} parent=63 // pred_check
          %p1219 = pneg %p243
        $region66: #{tpu_custom_call.1} parent=63 // pred_check_branch
          %1221 = sbr.rel (%p1219) target = $region68
        $region67: #{tpu_custom_call.1} parent=63 // pred_region
          %s1222 = sand.u32 %s228, 1
          %s1223 = scalar_lea.sflag [#allocation4], %s1222
          %s1224 = sand.u32 %s228, 1
          %s1225 = smul.addr %s1224, 2
          %s1226 = scalar_lea.vmem [#allocation3], %s1225
          %1228 = dma.done %s1223, 32
        $region68: #{tpu_custom_call.1} parent=63 // pred_fallthru
          _
      $region64: #{tpu_custom_call.1} parent=5 // pred_fallthru
        _
    $region6: #{tpu_custom_call.1} parent=1 // loop_footer
      %s24 = sadd.s32 1, %s20
    $region7: #{tpu_custom_call.1} parent=1 // loop_footer_branch
      %19 = sbr.rel target = $region3
    $region8: #{tpu_custom_call.1} parent=1 // loop_exit
      _
    %1229 = vsyncpa [#allocation4], 1
    %s1230 = scalar_lea.sflag [#allocation4], 1
    %1231 = vsyncpa %s1230, 1

</llo_original>
